<compile_context>
chip_gen: v7x
topology: tpu7x:2x2x1
jax: 0.10.0
libtpu: 0.0.40
codegen_flags: <defaults>
</compile_context>

<pallas_src>
import functools

import jax
import jax.numpy as jnp
from jax.experimental import pallas as pl
from jax.experimental.pallas import tpu as pltpu

LANE = 128  # vreg lane width


def _round_up(x, m):
    return (x + m - 1) // m * m


def mlp_kernel(x_ref, w1_ref, w2_ref, b2_ref, w3_ref, b3_ref,
               w4_ref, b4_ref, w5_ref, b5_ref, o_ref, *, compute_dtype):
    """One batch-tile of the fused 5-layer MLP; weights/biases VMEM-resident."""
    x = x_ref[...].astype(compute_dtype)

    # layer 1: Linear(input, hidden, bias=False) + ReLU
    h = jnp.dot(x, w1_ref[...], preferred_element_type=jnp.float32)
    h = jnp.maximum(h, 0.0)

    # layer 2: Linear + ReLU (bias add rides free on the VPU)
    h = jnp.dot(h.astype(compute_dtype), w2_ref[...],
                preferred_element_type=jnp.float32) + b2_ref[...]
    h = jnp.maximum(h, 0.0)

    # layer 3: Linear + ReLU
    h = jnp.dot(h.astype(compute_dtype), w3_ref[...],
                preferred_element_type=jnp.float32) + b3_ref[...]
    h = jnp.maximum(h, 0.0)

    # layer 4: Linear + sigmoid (EUP)
    h = jnp.dot(h.astype(compute_dtype), w4_ref[...],
                preferred_element_type=jnp.float32) + b4_ref[...]
    h = jax.nn.sigmoid(h)

    # layer 5: Linear (no activation); lane-dense (padded) output store
    out = jnp.dot(h.astype(compute_dtype), w5_ref[...],
                  preferred_element_type=jnp.float32) + b5_ref[...]
    o_ref[...] = out.astype(o_ref.dtype)


@functools.partial(jax.jit, static_argnames=("block_batch", "compute_dtype"))
def mlp_forward(x, w1, w2, b2, w3, b3, w4, b4, w5, b5,
                *, block_batch=None, compute_dtype=jnp.float32):
    """x: (B, in_dim) f32; weights are (in, out) = transpose of PyTorch's (out, in)."""
    batch, in_dim = x.shape
    hid = w1.shape[1]
    out_dim = w5.shape[1]

    # Lane-dense padded feature dims (zero-padding is exact: padded weight rows are 0,
    # so padded activation lanes never contribute to real outputs).
    in_p = _round_up(in_dim, LANE)
    hid_p = _round_up(hid, LANE)
    out_p = _round_up(out_dim, LANE)

    # Batch tile: big enough to amortize the ~600-cycle per-step overhead at scale,
    # small enough to keep the test batch from over-padding.
    tb = block_batch if block_batch is not None else min(512, _round_up(batch, 8))
    batch_p = _round_up(batch, tb)

    def pad2(a, rows, cols):
        return jnp.pad(a, ((0, rows - a.shape[0]), (0, cols - a.shape[1])))

    xp = pad2(x, batch_p, in_p)
    w1p = pad2(w1, in_p, hid_p).astype(compute_dtype)
    w2p = pad2(w2, hid_p, hid_p).astype(compute_dtype)
    w3p = pad2(w3, hid_p, hid_p).astype(compute_dtype)
    w4p = pad2(w4, hid_p, hid_p).astype(compute_dtype)
    w5p = pad2(w5, hid_p, out_p).astype(compute_dtype)
    b2p = pad2(b2, 1, hid_p)
    b3p = pad2(b3, 1, hid_p)
    b4p = pad2(b4, 1, hid_p)
    b5p = pad2(b5, 1, out_p)

    grid = (batch_p // tb,)

    x_spec = pl.BlockSpec((tb, in_p), lambda i: (i, 0))
    out_spec = pl.BlockSpec((tb, out_p), lambda i: (i, 0))

    def resident(shape):
        # Same block for every grid step -> stays in VMEM across the whole grid.
        return pl.BlockSpec(shape, lambda i: (0, 0))

    itemsize = jnp.dtype(compute_dtype).itemsize
    flops = 2 * batch_p * (in_p * hid_p + 3 * hid_p * hid_p + hid_p * out_p)
    bytes_accessed = (
        xp.size * 4
        + (w1p.size + w2p.size + w3p.size + w4p.size + w5p.size) * itemsize
        + (b2p.size + b3p.size + b4p.size + b5p.size) * 4
        + batch_p * out_p * 4)
    cost = pl.CostEstimate(flops=flops,
                           transcendentals=batch_p * hid_p,   # sigmoid on layer 4
                           bytes_accessed=bytes_accessed)

    kernel = functools.partial(mlp_kernel, compute_dtype=compute_dtype)

    out_padded = pl.pallas_call(
        kernel,
        out_shape=jax.ShapeDtypeStruct((batch_p, out_p), jnp.float32),
        grid=grid,
        in_specs=[
            x_spec,
            resident((in_p, hid_p)),
            resident((hid_p, hid_p)), resident((1, hid_p)),
            resident((hid_p, hid_p)), resident((1, hid_p)),
            resident((hid_p, hid_p)), resident((1, hid_p)),
            resident((hid_p, out_p)), resident((1, out_p)),
        ],
        out_specs=out_spec,
        compiler_params=pltpu.CompilerParams(
            dimension_semantics=("parallel",),      # split batch grid across TCs (v7x)
            vmem_limit_bytes=64 * 1024 * 1024),     # fits v7x's smaller VMEM budget
        cost_estimate=cost,
    )(xp, w1p, w2p, b2p, w3p, b3p, w4p, b4p, w5p, b5p)

    return out_padded[:batch, :out_dim]


# ---------------------------------------------------------------------------
# Parameter init (mirrors the PyTorch module) and pure-JAX reference.
# ---------------------------------------------------------------------------
def trunc_normal(key, shape, std=1.0, lo=-2.0, hi=2.0):
    # matches torch.nn.init.trunc_normal_(mean=0, std=1, a=-2, b=2)
    return std * jax.random.truncated_normal(key, lo, hi, shape, dtype=jnp.float32)


def init_params(key, input_dim, hidden_dim, output_dim):
    keys = jax.random.split(key, 10)
    # Weights stored as (in, out) == transpose of PyTorch's (out, in).
    w1 = trunc_normal(keys[0], (input_dim, hidden_dim))
    w2 = trunc_normal(keys[1], (hidden_dim, hidden_dim))
    w3 = trunc_normal(keys[2], (hidden_dim, hidden_dim))
    w4 = trunc_normal(keys[3], (hidden_dim, hidden_dim))
    # layer_5 keeps PyTorch's default (Kaiming-uniform) init; emulate with uniform.
    bound5 = 1.0 / jnp.sqrt(hidden_dim)
    w5 = jax.random.uniform(keys[4], (hidden_dim, output_dim), jnp.float32,
                            -bound5, bound5)
    bh = 1.0 / jnp.sqrt(hidden_dim)
    b2 = jax.random.uniform(keys[5], (1, hidden_dim), jnp.float32, -bh, bh)
    b3 = jax.random.uniform(keys[6], (1, hidden_dim), jnp.float32, -bh, bh)
    b4 = jax.random.uniform(keys[7], (1, hidden_dim), jnp.float32, -bh, bh)
    b5 = jax.random.uniform(keys[8], (1, output_dim), jnp.float32, -bound5, bound5)
    return w1, w2, b2, w3, b3, w4, b4, w5, b5


def reference_forward(x, w1, w2, b2, w3, b3, w4, b4, w5, b5):
    h = jnp.maximum(x @ w1, 0.0)
    h = jnp.maximum(h @ w2 + b2, 0.0)
    h = jnp.maximum(h @ w3 + b3, 0.0)
    h = jax.nn.sigmoid(h @ w4 + b4)
    return h @ w5 + b5


if __name__ == "__main__":
    input_dim, hidden_dim, output_dim = 16, 32, 8
    batch = 8

    key = jax.random.PRNGKey(0)
    k_x, k_p = jax.random.split(key)
    x = jax.random.normal(k_x, (batch, input_dim), dtype=jnp.float32)
    params = init_params(k_p, input_dim, hidden_dim, output_dim)

    out = mlp_forward(x, *params)
    out = jax.block_until_ready(out)

    ref = reference_forward(x, *params)
    assert out.shape == (batch, output_dim)
    assert jnp.allclose(out, ref, atol=1e-4, rtol=1e-4), "mismatch vs reference"

    print("KERNEL_OK")
</pallas_src>

<mosaic_0001>
module attributes {stable_mosaic.version = 11 : i64} {
  func.func @mlp_kernel(%arg0: i32, %arg1: memref<8x128xf32, #tpu.memory_space<vmem>>, %arg2: memref<128x128xf32, #tpu.memory_space<vmem>>, %arg3: memref<128x128xf32, #tpu.memory_space<vmem>>, %arg4: memref<1x128xf32, #tpu.memory_space<vmem>>, %arg5: memref<128x128xf32, #tpu.memory_space<vmem>>, %arg6: memref<1x128xf32, #tpu.memory_space<vmem>>, %arg7: memref<128x128xf32, #tpu.memory_space<vmem>>, %arg8: memref<1x128xf32, #tpu.memory_space<vmem>>, %arg9: memref<128x128xf32, #tpu.memory_space<vmem>>, %arg10: memref<1x128xf32, #tpu.memory_space<vmem>>, %arg11: memref<8x128xf32, #tpu.memory_space<vmem>>) attributes {dimension_semantics = [#tpu.dimension_semantics<parallel>], iteration_bounds = array<i64: 1>, scalar_prefetch = 0 : i64, scratch_operands = 0 : i64, tpu.core_type = #tpu.core_type<tc>, window_params = [{transform_indices = @transform_0, window_bounds = array<i64: 8, 128>}, {pipeline_mode = #tpu.pipeline_mode<synchronous>, transform_indices = @transform_1, window_bounds = array<i64: 128, 128>}, {pipeline_mode = #tpu.pipeline_mode<synchronous>, transform_indices = @transform_2, window_bounds = array<i64: 128, 128>}, {pipeline_mode = #tpu.pipeline_mode<synchronous>, transform_indices = @transform_3, window_bounds = array<i64: 1, 128>}, {pipeline_mode = #tpu.pipeline_mode<synchronous>, transform_indices = @transform_4, window_bounds = array<i64: 128, 128>}, {pipeline_mode = #tpu.pipeline_mode<synchronous>, transform_indices = @transform_5, window_bounds = array<i64: 1, 128>}, {pipeline_mode = #tpu.pipeline_mode<synchronous>, transform_indices = @transform_6, window_bounds = array<i64: 128, 128>}, {pipeline_mode = #tpu.pipeline_mode<synchronous>, transform_indices = @transform_7, window_bounds = array<i64: 1, 128>}, {pipeline_mode = #tpu.pipeline_mode<synchronous>, transform_indices = @transform_8, window_bounds = array<i64: 128, 128>}, {pipeline_mode = #tpu.pipeline_mode<synchronous>, transform_indices = @transform_9, window_bounds = array<i64: 1, 128>}, {transform_indices = @transform_10, window_bounds = array<i64: 8, 128>}]} {
    %c0 = arith.constant 0 : index
    %c0_0 = arith.constant 0 : index
    %0 = vector.load %arg1[%c0, %c0_0] : memref<8x128xf32, #tpu.memory_space<vmem>>, vector<8x128xf32>
    %c0_1 = arith.constant 0 : index
    %c0_2 = arith.constant 0 : index
    %1 = vector.load %arg2[%c0_1, %c0_2] : memref<128x128xf32, #tpu.memory_space<vmem>>, vector<128x128xf32>
    %cst = arith.constant dense<0.000000e+00> : vector<8x128xf32>
    %2 = tpu.matmul %0, %1, %cst {dimension_numbers = #tpu.dot_dimension_numbers<[1], [0], [0], [1], [0, 0, 1, 1], [], []>} : vector<8x128xf32>, vector<128x128xf32>, vector<8x128xf32> -> vector<8x128xf32>
    %cst_3 = arith.constant 0.000000e+00 : f32
    %3 = vector.broadcast %cst_3 : f32 to vector<8x128xf32>
    %4 = arith.maximumf %2, %3 : vector<8x128xf32>
    %c0_4 = arith.constant 0 : index
    %c0_5 = arith.constant 0 : index
    %5 = vector.load %arg3[%c0_4, %c0_5] : memref<128x128xf32, #tpu.memory_space<vmem>>, vector<128x128xf32>
    %cst_6 = arith.constant dense<0.000000e+00> : vector<8x128xf32>
    %6 = tpu.matmul %4, %5, %cst_6 {dimension_numbers = #tpu.dot_dimension_numbers<[1], [0], [0], [1], [0, 0, 1, 1], [], []>} : vector<8x128xf32>, vector<128x128xf32>, vector<8x128xf32> -> vector<8x128xf32>
    %c0_7 = arith.constant 0 : index
    %c0_8 = arith.constant 0 : index
    %7 = vector.load %arg4[%c0_7, %c0_8] : memref<1x128xf32, #tpu.memory_space<vmem>>, vector<1x128xf32>
    %8 = vector.broadcast %7 : vector<1x128xf32> to vector<8x128xf32>
    %9 = arith.addf %6, %8 : vector<8x128xf32>
    %cst_9 = arith.constant 0.000000e+00 : f32
    %10 = vector.broadcast %cst_9 : f32 to vector<8x128xf32>
    %11 = arith.maximumf %9, %10 : vector<8x128xf32>
    %c0_10 = arith.constant 0 : index
    %c0_11 = arith.constant 0 : index
    %12 = vector.load %arg5[%c0_10, %c0_11] : memref<128x128xf32, #tpu.memory_space<vmem>>, vector<128x128xf32>
    %cst_12 = arith.constant dense<0.000000e+00> : vector<8x128xf32>
    %13 = tpu.matmul %11, %12, %cst_12 {dimension_numbers = #tpu.dot_dimension_numbers<[1], [0], [0], [1], [0, 0, 1, 1], [], []>} : vector<8x128xf32>, vector<128x128xf32>, vector<8x128xf32> -> vector<8x128xf32>
    %c0_13 = arith.constant 0 : index
    %c0_14 = arith.constant 0 : index
    %14 = vector.load %arg6[%c0_13, %c0_14] : memref<1x128xf32, #tpu.memory_space<vmem>>, vector<1x128xf32>
    %15 = vector.broadcast %14 : vector<1x128xf32> to vector<8x128xf32>
    %16 = arith.addf %13, %15 : vector<8x128xf32>
    %cst_15 = arith.constant 0.000000e+00 : f32
    %17 = vector.broadcast %cst_15 : f32 to vector<8x128xf32>
    %18 = arith.maximumf %16, %17 : vector<8x128xf32>
    %c0_16 = arith.constant 0 : index
    %c0_17 = arith.constant 0 : index
    %19 = vector.load %arg7[%c0_16, %c0_17] : memref<128x128xf32, #tpu.memory_space<vmem>>, vector<128x128xf32>
    %cst_18 = arith.constant dense<0.000000e+00> : vector<8x128xf32>
    %20 = tpu.matmul %18, %19, %cst_18 {dimension_numbers = #tpu.dot_dimension_numbers<[1], [0], [0], [1], [0, 0, 1, 1], [], []>} : vector<8x128xf32>, vector<128x128xf32>, vector<8x128xf32> -> vector<8x128xf32>
    %c0_19 = arith.constant 0 : index
    %c0_20 = arith.constant 0 : index
    %21 = vector.load %arg8[%c0_19, %c0_20] : memref<1x128xf32, #tpu.memory_space<vmem>>, vector<1x128xf32>
    %22 = vector.broadcast %21 : vector<1x128xf32> to vector<8x128xf32>
    %23 = arith.addf %20, %22 : vector<8x128xf32>
    %24 = arith.negf %23 : vector<8x128xf32>
    %25 = math.exp %24 : vector<8x128xf32>
    %cst_21 = arith.constant 1.000000e+00 : f32
    %26 = vector.broadcast %cst_21 : f32 to vector<8x128xf32>
    %27 = arith.addf %26, %25 : vector<8x128xf32>
    %28 = arith.divf %26, %27 : vector<8x128xf32>
    %c0_22 = arith.constant 0 : index
    %c0_23 = arith.constant 0 : index
    %29 = vector.load %arg9[%c0_22, %c0_23] : memref<128x128xf32, #tpu.memory_space<vmem>>, vector<128x128xf32>
    %cst_24 = arith.constant dense<0.000000e+00> : vector<8x128xf32>
    %30 = tpu.matmul %28, %29, %cst_24 {dimension_numbers = #tpu.dot_dimension_numbers<[1], [0], [0], [1], [0, 0, 1, 1], [], []>} : vector<8x128xf32>, vector<128x128xf32>, vector<8x128xf32> -> vector<8x128xf32>
    %c0_25 = arith.constant 0 : index
    %c0_26 = arith.constant 0 : index
    %31 = vector.load %arg10[%c0_25, %c0_26] : memref<1x128xf32, #tpu.memory_space<vmem>>, vector<1x128xf32>
    %32 = vector.broadcast %31 : vector<1x128xf32> to vector<8x128xf32>
    %33 = arith.addf %30, %32 : vector<8x128xf32>
    %c0_27 = arith.constant 0 : index
    %c0_28 = arith.constant 0 : index
    %34 = vector.load %arg11[%c0_27, %c0_28] : memref<8x128xf32, #tpu.memory_space<vmem>>, vector<8x128xf32>
    tpu.vector_store %arg11[%c0_27, %c0_28], %33 {strides = array<i32>} : memref<8x128xf32, #tpu.memory_space<vmem>>, vector<8x128xf32>,
    return
  }
  func.func @transform_0(%arg0: i32) -> (i32, i32) {
    %c0_i32 = arith.constant 0 : i32
    %c0_i32_0 = arith.constant 0 : i32
    return %arg0, %c0_i32 : i32, i32
  }
  func.func @transform_1(%arg0: i32) -> (i32, i32) {
    %c0_i32 = arith.constant 0 : i32
    %c0_i32_0 = arith.constant 0 : i32
    %c0_i32_1 = arith.constant 0 : i32
    return %c0_i32, %c0_i32_0 : i32, i32
  }
  func.func @transform_2(%arg0: i32) -> (i32, i32) {
    %c0_i32 = arith.constant 0 : i32
    %c0_i32_0 = arith.constant 0 : i32
    %c0_i32_1 = arith.constant 0 : i32
    return %c0_i32, %c0_i32_0 : i32, i32
  }
  func.func @transform_3(%arg0: i32) -> (i32, i32) {
    %c0_i32 = arith.constant 0 : i32
    %c0_i32_0 = arith.constant 0 : i32
    %c0_i32_1 = arith.constant 0 : i32
    return %c0_i32, %c0_i32_0 : i32, i32
  }
  func.func @transform_4(%arg0: i32) -> (i32, i32) {
    %c0_i32 = arith.constant 0 : i32
    %c0_i32_0 = arith.constant 0 : i32
    %c0_i32_1 = arith.constant 0 : i32
    return %c0_i32, %c0_i32_0 : i32, i32
  }
  func.func @transform_5(%arg0: i32) -> (i32, i32) {
    %c0_i32 = arith.constant 0 : i32
    %c0_i32_0 = arith.constant 0 : i32
    %c0_i32_1 = arith.constant 0 : i32
    return %c0_i32, %c0_i32_0 : i32, i32
  }
  func.func @transform_6(%arg0: i32) -> (i32, i32) {
    %c0_i32 = arith.constant 0 : i32
    %c0_i32_0 = arith.constant 0 : i32
    %c0_i32_1 = arith.constant 0 : i32
    return %c0_i32, %c0_i32_0 : i32, i32
  }
  func.func @transform_7(%arg0: i32) -> (i32, i32) {
    %c0_i32 = arith.constant 0 : i32
    %c0_i32_0 = arith.constant 0 : i32
    %c0_i32_1 = arith.constant 0 : i32
    return %c0_i32, %c0_i32_0 : i32, i32
  }
  func.func @transform_8(%arg0: i32) -> (i32, i32) {
    %c0_i32 = arith.constant 0 : i32
    %c0_i32_0 = arith.constant 0 : i32
    %c0_i32_1 = arith.constant 0 : i32
    return %c0_i32, %c0_i32_0 : i32, i32
  }
  func.func @transform_9(%arg0: i32) -> (i32, i32) {
    %c0_i32 = arith.constant 0 : i32
    %c0_i32_0 = arith.constant 0 : i32
    %c0_i32_1 = arith.constant 0 : i32
    return %c0_i32, %c0_i32_0 : i32, i32
  }
  func.func @transform_10(%arg0: i32) -> (i32, i32) {
    %c0_i32 = arith.constant 0 : i32
    %c0_i32_0 = arith.constant 0 : i32
    return %arg0, %c0_i32 : i32, i32
  }
}

</mosaic_0001>

<llo_original>
// kernel: mlp_forward.1
$region0: #{mlp_forward.1}
  #allocation0 [shape = 'u32[]', space=smem, size = 0x4, offset = 0x4, fixed_abs, tag = 'smem constant byte address 0x4 - core index']
  #allocation1 [shape = 'u32[144,128]{1,0:T(1,128)}', space=vmem, size = 0x12000, scoped, tag = 'internal scratch']
  %s0 = inlined_call_operand.hbm [shape: f32[8,128], index: 0, kind: input, shape index: {}]
  %s1 = inlined_call_operand.hbm [shape: f32[128,128], index: 1, kind: input, shape index: {}]
  %s2 = inlined_call_operand.hbm [shape: f32[128,128], index: 2, kind: input, shape index: {}]
  %s3 = inlined_call_operand.hbm [shape: f32[1,128], index: 3, kind: input, shape index: {}]
  %s4 = inlined_call_operand.hbm [shape: f32[128,128], index: 4, kind: input, shape index: {}]
  %s5 = inlined_call_operand.hbm [shape: f32[1,128], index: 5, kind: input, shape index: {}]
  %s6 = inlined_call_operand.hbm [shape: f32[128,128], index: 6, kind: input, shape index: {}]
  %s7 = inlined_call_operand.hbm [shape: f32[1,128], index: 7, kind: input, shape index: {}]
  %s8 = inlined_call_operand.hbm [shape: f32[128,128], index: 8, kind: input, shape index: {}]
  %s9 = inlined_call_operand.hbm [shape: f32[1,128], index: 9, kind: input, shape index: {}]
  %s10 = inlined_call_operand.hbm [shape: f32[8,128], index: 10, kind: output, shape index: {}]
  %s11 = sld [smem:[#allocation0]]
  $region90: #{mlp_forward.1} parent=0
    _
  %s13 = ssub.s32 1, %s11
  %s14 = scalar_select 0, %s13, %s11
  $region1: #{mlp_forward.1} parent=0
    #allocation2 [shape = 'u8[4096]{0}', space=vmem, size = 0x1000, scoped, tag = 'input window, operand 0, single buffered']
    #allocation3 [shape = 's32[1]{0}', space=sflag, size = 0x4, scoped, tag = 'scoped memory for mlp_forward.1']
    #allocation4 [shape = 's32[1]{0}', space=sflag, size = 0x4, scoped, tag = 'scoped memory for mlp_forward.1']
    #allocation5 [shape = 'u8[65536]{0}', space=vmem, size = 0x10000, scoped, tag = 'input window, operand 1, single buffered']
    #allocation6 [shape = 's32[1]{0}', space=sflag, size = 0x4, scoped, tag = 'scoped memory for mlp_forward.1']
    #allocation7 [shape = 'u8[65536]{0}', space=vmem, size = 0x10000, scoped, tag = 'input window, operand 2, single buffered']
    #allocation8 [shape = 'u8[512]{0}', space=vmem, size = 0x400, scoped, tag = 'input window, operand 3, single buffered']
    #allocation9 [shape = 's32[1]{0}', space=sflag, size = 0x4, scoped, tag = 'scoped memory for mlp_forward.1']
    #allocation10 [shape = 'u8[65536]{0}', space=vmem, size = 0x10000, scoped, tag = 'input window, operand 4, single buffered']
    #allocation11 [shape = 'u8[512]{0}', space=vmem, size = 0x400, scoped, tag = 'input window, operand 5, single buffered']
    #allocation12 [shape = 's32[1]{0}', space=sflag, size = 0x4, scoped, tag = 'scoped memory for mlp_forward.1']
    #allocation13 [shape = 'u8[65536]{0}', space=vmem, size = 0x10000, scoped, tag = 'input window, operand 6, single buffered']
    #allocation14 [shape = 'u8[512]{0}', space=vmem, size = 0x400, scoped, tag = 'input window, operand 7, single buffered']
    #allocation15 [shape = 's32[1]{0}', space=sflag, size = 0x4, scoped, tag = 'scoped memory for mlp_forward.1']
    #allocation16 [shape = 'u8[65536]{0}', space=vmem, size = 0x10000, scoped, tag = 'input window, operand 8, single buffered']
    #allocation17 [shape = 'u8[512]{0}', space=vmem, size = 0x400, scoped, tag = 'input window, operand 9, single buffered']
    #allocation18 [shape = 's32[1]{0}', space=sflag, size = 0x4, scoped, tag = 'scoped memory for mlp_forward.1']
    #allocation19 [shape = 'u8[4096]{0}', space=vmem, size = 0x1000, scoped, tag = 'output window, operand 0, single buffered']
    %15 = vsyncpa [#allocation3], 0
    %16 = vsyncpa [#allocation6], 0
    %17 = vsyncpa [#allocation9], 0
    %18 = vsyncpa [#allocation12], 0
    %19 = vsyncpa [#allocation15], 0
    %20 = vsyncpa [#allocation18], 0
    %21 = vsyncpa [#allocation4], 0
    // Predicated region
    $region2: #{mlp_forward.1} parent=1 // pred_check
      _
    $region3: #{mlp_forward.1} parent=1 // pred_check_branch
      %23 = sbr.rel (0) target = $region5
    $region4: #{mlp_forward.1} parent=1 // pred_region
      %s25 = ssub.s32 128, 128
      %26 = vsyncadd [#allocation3], %s25
      %s28 = sshll.u32 [#allocation2], 4
      %s29 = int_to_ptr.vmem [resolvable:$true] %s28
      %31 = dma.hbm_to_vmem [thread:$0]  %s0, 128, %s29, [#allocation3]
    $region5: #{mlp_forward.1} parent=1 // pred_fallthru
      _
    // Predicated region
    $region6: #{mlp_forward.1} parent=1 // pred_check
      _
    $region7: #{mlp_forward.1} parent=1 // pred_check_branch
      %33 = sbr.rel (0) target = $region9
    $region8: #{mlp_forward.1} parent=1 // pred_region
      %s35 = ssub.s32 2048, 2048
      %36 = vsyncadd [#allocation6], %s35
      %s37 = sshll.u32 [#allocation5], 4
      %s38 = int_to_ptr.vmem [resolvable:$true] %s37
      %43 = dma.hbm_to_vmem [thread:$0]  %s1, 2048, %s38, [#allocation6], 128, 128, 8
    $region9: #{mlp_forward.1} parent=1 // pred_fallthru
      _
    // Predicated region
    $region10: #{mlp_forward.1} parent=1 // pred_check
      _
    $region11: #{mlp_forward.1} parent=1 // pred_check_branch
      %45 = sbr.rel (0) target = $region13
    $region12: #{mlp_forward.1} parent=1 // pred_region
      %s47 = ssub.s32 2048, 2048
      %48 = vsyncadd [#allocation6], %s47
      %s49 = sshll.u32 [#allocation7], 4
      %s50 = int_to_ptr.vmem [resolvable:$true] %s49
      %55 = dma.hbm_to_vmem [thread:$0]  %s2, 2048, %s50, [#allocation6], 128, 128, 8
    $region13: #{mlp_forward.1} parent=1 // pred_fallthru
      _
    // Predicated region
    $region14: #{mlp_forward.1} parent=1 // pred_check
      _
    $region15: #{mlp_forward.1} parent=1 // pred_check_branch
      %57 = sbr.rel (0) target = $region17
    $region16: #{mlp_forward.1} parent=1 // pred_region
      %s59 = ssub.s32 16, 16
      %60 = vsyncadd [#allocation9], %s59
      %s62 = sshll.u32 [#allocation8], 4
      %s63 = int_to_ptr.vmem [resolvable:$true] %s62
      %65 = dma.hbm_to_vmem [thread:$0]  %s3, 16, %s63, [#allocation9]
    $region17: #{mlp_forward.1} parent=1 // pred_fallthru
      _
    // Predicated region
    $region18: #{mlp_forward.1} parent=1 // pred_check
      _
    $region19: #{mlp_forward.1} parent=1 // pred_check_branch
      %67 = sbr.rel (0) target = $region21
    $region20: #{mlp_forward.1} parent=1 // pred_region
      %s69 = ssub.s32 2048, 2048
      %70 = vsyncadd [#allocation9], %s69
      %s71 = sshll.u32 [#allocation10], 4
      %s72 = int_to_ptr.vmem [resolvable:$true] %s71
      %77 = dma.hbm_to_vmem [thread:$0]  %s4, 2048, %s72, [#allocation9], 128, 128, 8
    $region21: #{mlp_forward.1} parent=1 // pred_fallthru
      _
    // Predicated region
    $region22: #{mlp_forward.1} parent=1 // pred_check
      _
    $region23: #{mlp_forward.1} parent=1 // pred_check_branch
      %79 = sbr.rel (0) target = $region25
    $region24: #{mlp_forward.1} parent=1 // pred_region
      %s81 = ssub.s32 16, 16
      %82 = vsyncadd [#allocation12], %s81
      %s84 = sshll.u32 [#allocation11], 4
      %s85 = int_to_ptr.vmem [resolvable:$true] %s84
      %87 = dma.hbm_to_vmem [thread:$0]  %s5, 16, %s85, [#allocation12]
    $region25: #{mlp_forward.1} parent=1 // pred_fallthru
      _
    // Predicated region
    $region26: #{mlp_forward.1} parent=1 // pred_check
      _
    $region27: #{mlp_forward.1} parent=1 // pred_check_branch
      %89 = sbr.rel (0) target = $region29
    $region28: #{mlp_forward.1} parent=1 // pred_region
      %s91 = ssub.s32 2048, 2048
      %92 = vsyncadd [#allocation12], %s91
      %s93 = sshll.u32 [#allocation13], 4
      %s94 = int_to_ptr.vmem [resolvable:$true] %s93
      %99 = dma.hbm_to_vmem [thread:$0]  %s6, 2048, %s94, [#allocation12], 128, 128, 8
    $region29: #{mlp_forward.1} parent=1 // pred_fallthru
      _
    // Predicated region
    $region30: #{mlp_forward.1} parent=1 // pred_check
      _
    $region31: #{mlp_forward.1} parent=1 // pred_check_branch
      %101 = sbr.rel (0) target = $region33
    $region32: #{mlp_forward.1} parent=1 // pred_region
      %s103 = ssub.s32 16, 16
      %104 = vsyncadd [#allocation15], %s103
      %s106 = sshll.u32 [#allocation14], 4
      %s107 = int_to_ptr.vmem [resolvable:$true] %s106
      %109 = dma.hbm_to_vmem [thread:$0]  %s7, 16, %s107, [#allocation15]
    $region33: #{mlp_forward.1} parent=1 // pred_fallthru
      _
    // Predicated region
    $region34: #{mlp_forward.1} parent=1 // pred_check
      _
    $region35: #{mlp_forward.1} parent=1 // pred_check_branch
      %111 = sbr.rel (0) target = $region37
    $region36: #{mlp_forward.1} parent=1 // pred_region
      %s113 = ssub.s32 2048, 2048
      %114 = vsyncadd [#allocation15], %s113
      %s115 = sshll.u32 [#allocation16], 4
      %s116 = int_to_ptr.vmem [resolvable:$true] %s115
      %121 = dma.hbm_to_vmem [thread:$0]  %s8, 2048, %s116, [#allocation15], 128, 128, 8
    $region37: #{mlp_forward.1} parent=1 // pred_fallthru
      _
    // Predicated region
    $region38: #{mlp_forward.1} parent=1 // pred_check
      _
    $region39: #{mlp_forward.1} parent=1 // pred_check_branch
      %123 = sbr.rel (0) target = $region41
    $region40: #{mlp_forward.1} parent=1 // pred_region
      %s125 = ssub.s32 16, 16
      %126 = vsyncadd [#allocation18], %s125
      %s128 = sshll.u32 [#allocation17], 4
      %s129 = int_to_ptr.vmem [resolvable:$true] %s128
      %131 = dma.hbm_to_vmem [thread:$0]  %s9, 16, %s129, [#allocation18]
    $region41: #{mlp_forward.1} parent=1 // pred_fallthru
      _
    // Predicated region
    $region42: #{mlp_forward.1} parent=1 // pred_check
      _
    $region43: #{mlp_forward.1} parent=1 // pred_check_branch
      %133 = sbr.rel (0) target = $region45
    $region44: #{mlp_forward.1} parent=1 // pred_region
      %134 = dma.done [#allocation3], 128
    $region45: #{mlp_forward.1} parent=1 // pred_fallthru
      _
    // Predicated region
    $region46: #{mlp_forward.1} parent=1 // pred_check
      _
    $region47: #{mlp_forward.1} parent=1 // pred_check_branch
      %136 = sbr.rel (0) target = $region49
    $region48: #{mlp_forward.1} parent=1 // pred_region
      %137 = dma.done [#allocation6], 2048
    $region49: #{mlp_forward.1} parent=1 // pred_fallthru
      _
    // Predicated region
    $region50: #{mlp_forward.1} parent=1 // pred_check
      _
    $region51: #{mlp_forward.1} parent=1 // pred_check_branch
      %139 = sbr.rel (0) target = $region53
    $region52: #{mlp_forward.1} parent=1 // pred_region
      %140 = dma.done [#allocation6], 2048
    $region53: #{mlp_forward.1} parent=1 // pred_fallthru
      _
    // Predicated region
    $region54: #{mlp_forward.1} parent=1 // pred_check
      _
    $region55: #{mlp_forward.1} parent=1 // pred_check_branch
      %142 = sbr.rel (0) target = $region57
    $region56: #{mlp_forward.1} parent=1 // pred_region
      %143 = dma.done [#allocation9], 16
    $region57: #{mlp_forward.1} parent=1 // pred_fallthru
      _
    // Predicated region
    $region58: #{mlp_forward.1} parent=1 // pred_check
      _
    $region59: #{mlp_forward.1} parent=1 // pred_check_branch
      %145 = sbr.rel (0) target = $region61
    $region60: #{mlp_forward.1} parent=1 // pred_region
      %146 = dma.done [#allocation9], 2048
    $region61: #{mlp_forward.1} parent=1 // pred_fallthru
      _
    // Predicated region
    $region62: #{mlp_forward.1} parent=1 // pred_check
      _
    $region63: #{mlp_forward.1} parent=1 // pred_check_branch
      %148 = sbr.rel (0) target = $region65
    $region64: #{mlp_forward.1} parent=1 // pred_region
      %149 = dma.done [#allocation12], 16
    $region65: #{mlp_forward.1} parent=1 // pred_fallthru
      _
    // Predicated region
    $region66: #{mlp_forward.1} parent=1 // pred_check
      _
    $region67: #{mlp_forward.1} parent=1 // pred_check_branch
      %151 = sbr.rel (0) target = $region69
    $region68: #{mlp_forward.1} parent=1 // pred_region
      %152 = dma.done [#allocation12], 2048
    $region69: #{mlp_forward.1} parent=1 // pred_fallthru
      _
    // Predicated region
    $region70: #{mlp_forward.1} parent=1 // pred_check
      _
    $region71: #{mlp_forward.1} parent=1 // pred_check_branch
      %154 = sbr.rel (0) target = $region73
    $region72: #{mlp_forward.1} parent=1 // pred_region
      %155 = dma.done [#allocation15], 16
    $region73: #{mlp_forward.1} parent=1 // pred_fallthru
      _
    // Predicated region
    $region74: #{mlp_forward.1} parent=1 // pred_check
      _
    $region75: #{mlp_forward.1} parent=1 // pred_check_branch
      %157 = sbr.rel (0) target = $region77
    $region76: #{mlp_forward.1} parent=1 // pred_region
      %158 = dma.done [#allocation15], 2048
    $region77: #{mlp_forward.1} parent=1 // pred_fallthru
      _
    // Predicated region
    $region78: #{mlp_forward.1} parent=1 // pred_check
      _
    $region79: #{mlp_forward.1} parent=1 // pred_check_branch
      %160 = sbr.rel (0) target = $region81
    $region80: #{mlp_forward.1} parent=1 // pred_region
      %161 = dma.done [#allocation18], 16
    $region81: #{mlp_forward.1} parent=1 // pred_fallthru
      _
    %v162 = vld [vmem:[#allocation2] sm:$0xff]
    %v163 = vld [vmem:[#allocation5] sm:$0xff]
    %v164 = vld [vmem:[#allocation5 + $0x8] sm:$0xff]
    %v165 = vld [vmem:[#allocation5 + $0x10] sm:$0xff]
    %v166 = vld [vmem:[#allocation5 + $0x18] sm:$0xff]
    %v167 = vld [vmem:[#allocation5 + $0x20] sm:$0xff]
    %v168 = vld [vmem:[#allocation5 + $0x28] sm:$0xff]
    %v169 = vld [vmem:[#allocation5 + $0x30] sm:$0xff]
    %v170 = vld [vmem:[#allocation5 + $0x38] sm:$0xff]
    %v171 = vld [vmem:[#allocation5 + $0x40] sm:$0xff]
    %v172 = vld [vmem:[#allocation5 + $0x48] sm:$0xff]
    %v173 = vld [vmem:[#allocation5 + $0x50] sm:$0xff]
    %v174 = vld [vmem:[#allocation5 + $0x58] sm:$0xff]
    %v175 = vld [vmem:[#allocation5 + $0x60] sm:$0xff]
    %v176 = vld [vmem:[#allocation5 + $0x68] sm:$0xff]
    %v177 = vld [vmem:[#allocation5 + $0x70] sm:$0xff]
    %v178 = vld [vmem:[#allocation5 + $0x78] sm:$0xff]
    %179 = vmatprep.subr.mxu0 0.0
    %180 = vmatpush1.msra.mxu0 %v163
    %181 = vmatprep.subr.mxu0 0.0
    %182 = vmatpush1.msra.mxu0 %v164
    %183 = vmatprep.subr.mxu0 0.0
    %184 = vmatpush1.msra.mxu0 %v165
    %185 = vmatprep.subr.mxu0 0.0
    %186 = vmatpush1.msra.mxu0 %v166
    %187 = vmatprep.subr.mxu0 0.0
    %188 = vmatpush1.msra.mxu0 %v167
    %189 = vmatprep.subr.mxu0 0.0
    %190 = vmatpush1.msra.mxu0 %v168
    %191 = vmatprep.subr.mxu0 0.0
    %192 = vmatpush1.msra.mxu0 %v169
    %193 = vmatprep.subr.mxu0 0.0
    %194 = vmatpush1.msra.mxu0 %v170
    %195 = vmatprep.subr.mxu0 0.0
    %196 = vmatpush1.msra.mxu0 %v171
    %197 = vmatprep.subr.mxu0 0.0
    %198 = vmatpush1.msra.mxu0 %v172
    %199 = vmatprep.subr.mxu0 0.0
    %200 = vmatpush1.msra.mxu0 %v173
    %201 = vmatprep.subr.mxu0 0.0
    %202 = vmatpush1.msra.mxu0 %v174
    %203 = vmatprep.subr.mxu0 0.0
    %204 = vmatpush1.msra.mxu0 %v175
    %205 = vmatprep.subr.mxu0 0.0
    %206 = vmatpush1.msra.mxu0 %v176
    %207 = vmatprep.subr.mxu0 0.0
    %208 = vmatpush1.msra.mxu0 %v177
    %209 = vmatprep.subr.mxu0 0.0
    %210 = vmatpush1.msra.mxu0 %v178
    %211 = vmatprep.subr.mxu0 0.0
    %212 = vmatpush1.msra.mxu0 0.0
    %213 = vmatprep.subr.mxu0 0.0
    %214 = vmatpush1.msra.mxu0 0.0
    %215 = vmatprep.subr.mxu0 0.0
    %216 = vmatpush1.msra.mxu0 0.0
    %217 = vmatprep.subr.mxu0 0.0
    %218 = vmatpush1.msra.mxu0 0.0
    %219 = vmatprep.subr.mxu0 0.0
    %220 = vmatpush1.msra.mxu0 0.0
    %221 = vmatprep.subr.mxu0 0.0
    %222 = vmatpush1.msra.mxu0 0.0
    %223 = vmatprep.subr.mxu0 0.0
    %224 = vmatpush1.msra.mxu0 0.0
    %225 = vmatprep.subr.mxu0 0.0
    %226 = vmatpush1.msra.mxu0 0.0
    %227 = vmatprep.subr.mxu0 0.0
    %228 = vmatpush1.msra.mxu0 0.0
    %229 = vmatprep.subr.mxu0 0.0
    %230 = vmatpush1.msra.mxu0 0.0
    %231 = vmatprep.subr.mxu0 0.0
    %232 = vmatpush1.msra.mxu0 0.0
    %233 = vmatprep.subr.mxu0 0.0
    %234 = vmatpush1.msra.mxu0 0.0
    %235 = vmatprep.subr.mxu0 0.0
    %236 = vmatpush1.msra.mxu0 0.0
    %237 = vmatprep.subr.mxu0 0.0
    %238 = vmatpush1.msra.mxu0 0.0
    %239 = vmatprep.subr.mxu0 0.0
    %240 = vmatpush1.msra.mxu0 0.0
    %241 = vmatprep.subr.mxu0 0.0
    %242 = vmatpush1.msra.mxu0 0.0
    %243 = vmatprep.mubr.f32.mxu0 0.0
    %244 = vmatmul.mubr.f32.gmra.mrb[0].mxu0 %v162
    %v245 = vpop.f32.mrb[0].mxu0
    %v246 = vadd.f32 0.0, %v245
    %v247 = vpop.f32.mrb[0].mxu0
    %248 = vdwg.mxu0
    %v249 = vmax.f32 %v246, 0.0
    %v250 = vld [vmem:[#allocation7] sm:$0xff]
    %v251 = vld [vmem:[#allocation7 + $0x8] sm:$0xff]
    %v252 = vld [vmem:[#allocation7 + $0x10] sm:$0xff]
    %v253 = vld [vmem:[#allocation7 + $0x18] sm:$0xff]
    %v254 = vld [vmem:[#allocation7 + $0x20] sm:$0xff]
    %v255 = vld [vmem:[#allocation7 + $0x28] sm:$0xff]
    %v256 = vld [vmem:[#allocation7 + $0x30] sm:$0xff]
    %v257 = vld [vmem:[#allocation7 + $0x38] sm:$0xff]
    %v258 = vld [vmem:[#allocation7 + $0x40] sm:$0xff]
    %v259 = vld [vmem:[#allocation7 + $0x48] sm:$0xff]
    %v260 = vld [vmem:[#allocation7 + $0x50] sm:$0xff]
    %v261 = vld [vmem:[#allocation7 + $0x58] sm:$0xff]
    %v262 = vld [vmem:[#allocation7 + $0x60] sm:$0xff]
    %v263 = vld [vmem:[#allocation7 + $0x68] sm:$0xff]
    %v264 = vld [vmem:[#allocation7 + $0x70] sm:$0xff]
    %v265 = vld [vmem:[#allocation7 + $0x78] sm:$0xff]
    %v266 = vld [vmem:[#allocation8] sm:$0x1]
    %v268 = vlaneseq
    %v269 = vshrl.u32 %v268, 7
    %v270 = vsub.s32 0, %v269
    %v271 = vrot.slane %v266, %v270
    %273 = vmatprep.subr.mxu0 0.0
    %274 = vmatpush1.msra.mxu0 %v250
    %275 = vmatprep.subr.mxu0 0.0
    %276 = vmatpush1.msra.mxu0 %v251
    %277 = vmatprep.subr.mxu0 0.0
    %278 = vmatpush1.msra.mxu0 %v252
    %279 = vmatprep.subr.mxu0 0.0
    %280 = vmatpush1.msra.mxu0 %v253
    %281 = vmatprep.subr.mxu0 0.0
    %282 = vmatpush1.msra.mxu0 %v254
    %283 = vmatprep.subr.mxu0 0.0
    %284 = vmatpush1.msra.mxu0 %v255
    %285 = vmatprep.subr.mxu0 0.0
    %286 = vmatpush1.msra.mxu0 %v256
    %287 = vmatprep.subr.mxu0 0.0
    %288 = vmatpush1.msra.mxu0 %v257
    %289 = vmatprep.subr.mxu0 0.0
    %290 = vmatpush1.msra.mxu0 %v258
    %291 = vmatprep.subr.mxu0 0.0
    %292 = vmatpush1.msra.mxu0 %v259
    %293 = vmatprep.subr.mxu0 0.0
    %294 = vmatpush1.msra.mxu0 %v260
    %295 = vmatprep.subr.mxu0 0.0
    %296 = vmatpush1.msra.mxu0 %v261
    %297 = vmatprep.subr.mxu0 0.0
    %298 = vmatpush1.msra.mxu0 %v262
    %299 = vmatprep.subr.mxu0 0.0
    %300 = vmatpush1.msra.mxu0 %v263
    %301 = vmatprep.subr.mxu0 0.0
    %302 = vmatpush1.msra.mxu0 %v264
    %303 = vmatprep.subr.mxu0 0.0
    %304 = vmatpush1.msra.mxu0 %v265
    %305 = vmatprep.subr.mxu0 0.0
    %306 = vmatpush1.msra.mxu0 0.0
    %307 = vmatprep.subr.mxu0 0.0
    %308 = vmatpush1.msra.mxu0 0.0
    %309 = vmatprep.subr.mxu0 0.0
    %310 = vmatpush1.msra.mxu0 0.0
    %311 = vmatprep.subr.mxu0 0.0
    %312 = vmatpush1.msra.mxu0 0.0
    %313 = vmatprep.subr.mxu0 0.0
    %314 = vmatpush1.msra.mxu0 0.0
    %315 = vmatprep.subr.mxu0 0.0
    %316 = vmatpush1.msra.mxu0 0.0
    %317 = vmatprep.subr.mxu0 0.0
    %318 = vmatpush1.msra.mxu0 0.0
    %319 = vmatprep.subr.mxu0 0.0
    %320 = vmatpush1.msra.mxu0 0.0
    %321 = vmatprep.subr.mxu0 0.0
    %322 = vmatpush1.msra.mxu0 0.0
    %323 = vmatprep.subr.mxu0 0.0
    %324 = vmatpush1.msra.mxu0 0.0
    %325 = vmatprep.subr.mxu0 0.0
    %326 = vmatpush1.msra.mxu0 0.0
    %327 = vmatprep.subr.mxu0 0.0
    %328 = vmatpush1.msra.mxu0 0.0
    %329 = vmatprep.subr.mxu0 0.0
    %330 = vmatpush1.msra.mxu0 0.0
    %331 = vmatprep.subr.mxu0 0.0
    %332 = vmatpush1.msra.mxu0 0.0
    %333 = vmatprep.subr.mxu0 0.0
    %334 = vmatpush1.msra.mxu0 0.0
    %335 = vmatprep.subr.mxu0 0.0
    %336 = vmatpush1.msra.mxu0 0.0
    %337 = vmatprep.mubr.f32.mxu0 0.0
    %338 = vmatmul.mubr.f32.gmra.mrb[0].mxu0 %v249
    %v339 = vpop.f32.mrb[0].mxu0
    %v340 = vadd.f32 %v271, %v339
    %v341 = vpop.f32.mrb[0].mxu0
    %342 = vdwg.mxu0
    %v343 = vmax.f32 %v340, 0.0
    %v344 = vld [vmem:[#allocation10] sm:$0xff]
    %v345 = vld [vmem:[#allocation10 + $0x8] sm:$0xff]
    %v346 = vld [vmem:[#allocation10 + $0x10] sm:$0xff]
    %v347 = vld [vmem:[#allocation10 + $0x18] sm:$0xff]
    %v348 = vld [vmem:[#allocation10 + $0x20] sm:$0xff]
    %v349 = vld [vmem:[#allocation10 + $0x28] sm:$0xff]
    %v350 = vld [vmem:[#allocation10 + $0x30] sm:$0xff]
    %v351 = vld [vmem:[#allocation10 + $0x38] sm:$0xff]
    %v352 = vld [vmem:[#allocation10 + $0x40] sm:$0xff]
    %v353 = vld [vmem:[#allocation10 + $0x48] sm:$0xff]
    %v354 = vld [vmem:[#allocation10 + $0x50] sm:$0xff]
    %v355 = vld [vmem:[#allocation10 + $0x58] sm:$0xff]
    %v356 = vld [vmem:[#allocation10 + $0x60] sm:$0xff]
    %v357 = vld [vmem:[#allocation10 + $0x68] sm:$0xff]
    %v358 = vld [vmem:[#allocation10 + $0x70] sm:$0xff]
    %v359 = vld [vmem:[#allocation10 + $0x78] sm:$0xff]
    %v360 = vld [vmem:[#allocation11] sm:$0x1]
    %v362 = vlaneseq
    %v363 = vshrl.u32 %v362, 7
    %v364 = vsub.s32 0, %v363
    %v365 = vrot.slane %v360, %v364
    %367 = vmatprep.subr.mxu0 0.0
    %368 = vmatpush1.msra.mxu0 %v344
    %369 = vmatprep.subr.mxu0 0.0
    %370 = vmatpush1.msra.mxu0 %v345
    %371 = vmatprep.subr.mxu0 0.0
    %372 = vmatpush1.msra.mxu0 %v346
    %373 = vmatprep.subr.mxu0 0.0
    %374 = vmatpush1.msra.mxu0 %v347
    %375 = vmatprep.subr.mxu0 0.0
    %376 = vmatpush1.msra.mxu0 %v348
    %377 = vmatprep.subr.mxu0 0.0
    %378 = vmatpush1.msra.mxu0 %v349
    %379 = vmatprep.subr.mxu0 0.0
    %380 = vmatpush1.msra.mxu0 %v350
    %381 = vmatprep.subr.mxu0 0.0
    %382 = vmatpush1.msra.mxu0 %v351
    %383 = vmatprep.subr.mxu0 0.0
    %384 = vmatpush1.msra.mxu0 %v352
    %385 = vmatprep.subr.mxu0 0.0
    %386 = vmatpush1.msra.mxu0 %v353
    %387 = vmatprep.subr.mxu0 0.0
    %388 = vmatpush1.msra.mxu0 %v354
    %389 = vmatprep.subr.mxu0 0.0
    %390 = vmatpush1.msra.mxu0 %v355
    %391 = vmatprep.subr.mxu0 0.0
    %392 = vmatpush1.msra.mxu0 %v356
    %393 = vmatprep.subr.mxu0 0.0
    %394 = vmatpush1.msra.mxu0 %v357
    %395 = vmatprep.subr.mxu0 0.0
    %396 = vmatpush1.msra.mxu0 %v358
    %397 = vmatprep.subr.mxu0 0.0
    %398 = vmatpush1.msra.mxu0 %v359
    %399 = vmatprep.subr.mxu0 0.0
    %400 = vmatpush1.msra.mxu0 0.0
    %401 = vmatprep.subr.mxu0 0.0
    %402 = vmatpush1.msra.mxu0 0.0
    %403 = vmatprep.subr.mxu0 0.0
    %404 = vmatpush1.msra.mxu0 0.0
    %405 = vmatprep.subr.mxu0 0.0
    %406 = vmatpush1.msra.mxu0 0.0
    %407 = vmatprep.subr.mxu0 0.0
    %408 = vmatpush1.msra.mxu0 0.0
    %409 = vmatprep.subr.mxu0 0.0
    %410 = vmatpush1.msra.mxu0 0.0
    %411 = vmatprep.subr.mxu0 0.0
    %412 = vmatpush1.msra.mxu0 0.0
    %413 = vmatprep.subr.mxu0 0.0
    %414 = vmatpush1.msra.mxu0 0.0
    %415 = vmatprep.subr.mxu0 0.0
    %416 = vmatpush1.msra.mxu0 0.0
    %417 = vmatprep.subr.mxu0 0.0
    %418 = vmatpush1.msra.mxu0 0.0
    %419 = vmatprep.subr.mxu0 0.0
    %420 = vmatpush1.msra.mxu0 0.0
    %421 = vmatprep.subr.mxu0 0.0
    %422 = vmatpush1.msra.mxu0 0.0
    %423 = vmatprep.subr.mxu0 0.0
    %424 = vmatpush1.msra.mxu0 0.0
    %425 = vmatprep.subr.mxu0 0.0
    %426 = vmatpush1.msra.mxu0 0.0
    %427 = vmatprep.subr.mxu0 0.0
    %428 = vmatpush1.msra.mxu0 0.0
    %429 = vmatprep.subr.mxu0 0.0
    %430 = vmatpush1.msra.mxu0 0.0
    %431 = vmatprep.mubr.f32.mxu0 0.0
    %432 = vmatmul.mubr.f32.gmra.mrb[0].mxu0 %v343
    %v433 = vpop.f32.mrb[0].mxu0
    %v434 = vadd.f32 %v365, %v433
    %v435 = vpop.f32.mrb[0].mxu0
    %436 = vdwg.mxu0
    %v437 = vmax.f32 %v434, 0.0
    %v438 = vld [vmem:[#allocation13] sm:$0xff]
    %v439 = vld [vmem:[#allocation13 + $0x8] sm:$0xff]
    %v440 = vld [vmem:[#allocation13 + $0x10] sm:$0xff]
    %v441 = vld [vmem:[#allocation13 + $0x18] sm:$0xff]
    %v442 = vld [vmem:[#allocation13 + $0x20] sm:$0xff]
    %v443 = vld [vmem:[#allocation13 + $0x28] sm:$0xff]
    %v444 = vld [vmem:[#allocation13 + $0x30] sm:$0xff]
    %v445 = vld [vmem:[#allocation13 + $0x38] sm:$0xff]
    %v446 = vld [vmem:[#allocation13 + $0x40] sm:$0xff]
    %v447 = vld [vmem:[#allocation13 + $0x48] sm:$0xff]
    %v448 = vld [vmem:[#allocation13 + $0x50] sm:$0xff]
    %v449 = vld [vmem:[#allocation13 + $0x58] sm:$0xff]
    %v450 = vld [vmem:[#allocation13 + $0x60] sm:$0xff]
    %v451 = vld [vmem:[#allocation13 + $0x68] sm:$0xff]
    %v452 = vld [vmem:[#allocation13 + $0x70] sm:$0xff]
    %v453 = vld [vmem:[#allocation13 + $0x78] sm:$0xff]
    %v454 = vld [vmem:[#allocation14] sm:$0x1]
    %v456 = vlaneseq
    %v457 = vshrl.u32 %v456, 7
    %v458 = vsub.s32 0, %v457
    %v459 = vrot.slane %v454, %v458
    %461 = vmatprep.subr.mxu0 0.0
    %462 = vmatpush1.msra.mxu0 %v438
    %463 = vmatprep.subr.mxu0 0.0
    %464 = vmatpush1.msra.mxu0 %v439
    %465 = vmatprep.subr.mxu0 0.0
    %466 = vmatpush1.msra.mxu0 %v440
    %467 = vmatprep.subr.mxu0 0.0
    %468 = vmatpush1.msra.mxu0 %v441
    %469 = vmatprep.subr.mxu0 0.0
    %470 = vmatpush1.msra.mxu0 %v442
    %471 = vmatprep.subr.mxu0 0.0
    %472 = vmatpush1.msra.mxu0 %v443
    %473 = vmatprep.subr.mxu0 0.0
    %474 = vmatpush1.msra.mxu0 %v444
    %475 = vmatprep.subr.mxu0 0.0
    %476 = vmatpush1.msra.mxu0 %v445
    %477 = vmatprep.subr.mxu0 0.0
    %478 = vmatpush1.msra.mxu0 %v446
    %479 = vmatprep.subr.mxu0 0.0
    %480 = vmatpush1.msra.mxu0 %v447
    %481 = vmatprep.subr.mxu0 0.0
    %482 = vmatpush1.msra.mxu0 %v448
    %483 = vmatprep.subr.mxu0 0.0
    %484 = vmatpush1.msra.mxu0 %v449
    %485 = vmatprep.subr.mxu0 0.0
    %486 = vmatpush1.msra.mxu0 %v450
    %487 = vmatprep.subr.mxu0 0.0
    %488 = vmatpush1.msra.mxu0 %v451
    %489 = vmatprep.subr.mxu0 0.0
    %490 = vmatpush1.msra.mxu0 %v452
    %491 = vmatprep.subr.mxu0 0.0
    %492 = vmatpush1.msra.mxu0 %v453
    %493 = vmatprep.subr.mxu0 0.0
    %494 = vmatpush1.msra.mxu0 0.0
    %495 = vmatprep.subr.mxu0 0.0
    %496 = vmatpush1.msra.mxu0 0.0
    %497 = vmatprep.subr.mxu0 0.0
    %498 = vmatpush1.msra.mxu0 0.0
    %499 = vmatprep.subr.mxu0 0.0
    %500 = vmatpush1.msra.mxu0 0.0
    %501 = vmatprep.subr.mxu0 0.0
    %502 = vmatpush1.msra.mxu0 0.0
    %503 = vmatprep.subr.mxu0 0.0
    %504 = vmatpush1.msra.mxu0 0.0
    %505 = vmatprep.subr.mxu0 0.0
    %506 = vmatpush1.msra.mxu0 0.0
    %507 = vmatprep.subr.mxu0 0.0
    %508 = vmatpush1.msra.mxu0 0.0
    %509 = vmatprep.subr.mxu0 0.0
    %510 = vmatpush1.msra.mxu0 0.0
    %511 = vmatprep.subr.mxu0 0.0
    %512 = vmatpush1.msra.mxu0 0.0
    %513 = vmatprep.subr.mxu0 0.0
    %514 = vmatpush1.msra.mxu0 0.0
    %515 = vmatprep.subr.mxu0 0.0
    %516 = vmatpush1.msra.mxu0 0.0
    %517 = vmatprep.subr.mxu0 0.0
    %518 = vmatpush1.msra.mxu0 0.0
    %519 = vmatprep.subr.mxu0 0.0
    %520 = vmatpush1.msra.mxu0 0.0
    %521 = vmatprep.subr.mxu0 0.0
    %522 = vmatpush1.msra.mxu0 0.0
    %523 = vmatprep.subr.mxu0 0.0
    %524 = vmatpush1.msra.mxu0 0.0
    %525 = vmatprep.mubr.f32.mxu0 0.0
    %526 = vmatmul.mubr.f32.gmra.mrb[0].mxu0 %v437
    %v527 = vpop.f32.mrb[0].mxu0
    %v528 = vadd.f32 %v459, %v527
    %v529 = vpop.f32.mrb[0].mxu0
    %530 = vdwg.mxu0
    %v531 = vxor.u32 %v528, 2147483648
    %v532 = vmul.f32 %v531, 1.442695
    %v533 = vpow.pop %v532
    %v534 = vadd.f32 %v533, 1.0
    %v535 = vrcp.pop %v534
    %v536 = vmul.f32 1.0, %v535
    %v537 = vld [vmem:[#allocation16] sm:$0xff]
    %v538 = vld [vmem:[#allocation16 + $0x8] sm:$0xff]
    %v539 = vld [vmem:[#allocation16 + $0x10] sm:$0xff]
    %v540 = vld [vmem:[#allocation16 + $0x18] sm:$0xff]
    %v541 = vld [vmem:[#allocation16 + $0x20] sm:$0xff]
    %v542 = vld [vmem:[#allocation16 + $0x28] sm:$0xff]
    %v543 = vld [vmem:[#allocation16 + $0x30] sm:$0xff]
    %v544 = vld [vmem:[#allocation16 + $0x38] sm:$0xff]
    %v545 = vld [vmem:[#allocation16 + $0x40] sm:$0xff]
    %v546 = vld [vmem:[#allocation16 + $0x48] sm:$0xff]
    %v547 = vld [vmem:[#allocation16 + $0x50] sm:$0xff]
    %v548 = vld [vmem:[#allocation16 + $0x58] sm:$0xff]
    %v549 = vld [vmem:[#allocation16 + $0x60] sm:$0xff]
    %v550 = vld [vmem:[#allocation16 + $0x68] sm:$0xff]
    %v551 = vld [vmem:[#allocation16 + $0x70] sm:$0xff]
    %v552 = vld [vmem:[#allocation16 + $0x78] sm:$0xff]
    %v553 = vld [vmem:[#allocation17] sm:$0x1]
    %v555 = vlaneseq
    %v556 = vshrl.u32 %v555, 7
    %v557 = vsub.s32 0, %v556
    %v558 = vrot.slane %v553, %v557
    %560 = vmatprep.subr.mxu0 0.0
    %561 = vmatpush1.msra.mxu0 %v537
    %562 = vmatprep.subr.mxu0 0.0
    %563 = vmatpush1.msra.mxu0 %v538
    %564 = vmatprep.subr.mxu0 0.0
    %565 = vmatpush1.msra.mxu0 %v539
    %566 = vmatprep.subr.mxu0 0.0
    %567 = vmatpush1.msra.mxu0 %v540
    %568 = vmatprep.subr.mxu0 0.0
    %569 = vmatpush1.msra.mxu0 %v541
    %570 = vmatprep.subr.mxu0 0.0
    %571 = vmatpush1.msra.mxu0 %v542
    %572 = vmatprep.subr.mxu0 0.0
    %573 = vmatpush1.msra.mxu0 %v543
    %574 = vmatprep.subr.mxu0 0.0
    %575 = vmatpush1.msra.mxu0 %v544
    %576 = vmatprep.subr.mxu0 0.0
    %577 = vmatpush1.msra.mxu0 %v545
    %578 = vmatprep.subr.mxu0 0.0
    %579 = vmatpush1.msra.mxu0 %v546
    %580 = vmatprep.subr.mxu0 0.0
    %581 = vmatpush1.msra.mxu0 %v547
    %582 = vmatprep.subr.mxu0 0.0
    %583 = vmatpush1.msra.mxu0 %v548
    %584 = vmatprep.subr.mxu0 0.0
    %585 = vmatpush1.msra.mxu0 %v549
    %586 = vmatprep.subr.mxu0 0.0
    %587 = vmatpush1.msra.mxu0 %v550
    %588 = vmatprep.subr.mxu0 0.0
    %589 = vmatpush1.msra.mxu0 %v551
    %590 = vmatprep.subr.mxu0 0.0
    %591 = vmatpush1.msra.mxu0 %v552
    %592 = vmatprep.subr.mxu0 0.0
    %593 = vmatpush1.msra.mxu0 0.0
    %594 = vmatprep.subr.mxu0 0.0
    %595 = vmatpush1.msra.mxu0 0.0
    %596 = vmatprep.subr.mxu0 0.0
    %597 = vmatpush1.msra.mxu0 0.0
    %598 = vmatprep.subr.mxu0 0.0
    %599 = vmatpush1.msra.mxu0 0.0
    %600 = vmatprep.subr.mxu0 0.0
    %601 = vmatpush1.msra.mxu0 0.0
    %602 = vmatprep.subr.mxu0 0.0
    %603 = vmatpush1.msra.mxu0 0.0
    %604 = vmatprep.subr.mxu0 0.0
    %605 = vmatpush1.msra.mxu0 0.0
    %606 = vmatprep.subr.mxu0 0.0
    %607 = vmatpush1.msra.mxu0 0.0
    %608 = vmatprep.subr.mxu0 0.0
    %609 = vmatpush1.msra.mxu0 0.0
    %610 = vmatprep.subr.mxu0 0.0
    %611 = vmatpush1.msra.mxu0 0.0
    %612 = vmatprep.subr.mxu0 0.0
    %613 = vmatpush1.msra.mxu0 0.0
    %614 = vmatprep.subr.mxu0 0.0
    %615 = vmatpush1.msra.mxu0 0.0
    %616 = vmatprep.subr.mxu0 0.0
    %617 = vmatpush1.msra.mxu0 0.0
    %618 = vmatprep.subr.mxu0 0.0
    %619 = vmatpush1.msra.mxu0 0.0
    %620 = vmatprep.subr.mxu0 0.0
    %621 = vmatpush1.msra.mxu0 0.0
    %622 = vmatprep.subr.mxu0 0.0
    %623 = vmatpush1.msra.mxu0 0.0
    %624 = vmatprep.mubr.f32.mxu0 0.0
    %625 = vmatmul.mubr.f32.gmra.mrb[0].mxu0 %v536
    %v626 = vpop.f32.mrb[0].mxu0
    %v627 = vadd.f32 %v558, %v626
    %v628 = vpop.f32.mrb[0].mxu0
    %629 = vdwg.mxu0
    %630 = vst [vmem:[#allocation19] sm:$0xff] %v627
    // Predicated region
    $region82: #{mlp_forward.1} parent=1 // pred_check
      _
    $region83: #{mlp_forward.1} parent=1 // pred_check_branch
      %632 = sbr.rel (0) target = $region85
    $region84: #{mlp_forward.1} parent=1 // pred_region
      %s634 = ssub.s32 128, 128
      %635 = vsyncadd [#allocation4], %s634
      %s637 = sshll.u32 [#allocation19], 4
      %s638 = int_to_ptr.vmem [resolvable:$true] %s637
      %640 = dma.vmem_to_hbm [thread:$0]  %s638, 128, %s10, [#allocation4]
    $region85: #{mlp_forward.1} parent=1 // pred_fallthru
      _
    // Predicated region
    $region86: #{mlp_forward.1} parent=1 // pred_check
      _
    $region87: #{mlp_forward.1} parent=1 // pred_check_branch
      %642 = sbr.rel (0) target = $region89
    $region88: #{mlp_forward.1} parent=1 // pred_region
      %643 = dma.done [#allocation4], 128
    $region89: #{mlp_forward.1} parent=1 // pred_fallthru
      _
    %644 = vsyncpa [#allocation3], 1
    %645 = vsyncpa [#allocation6], 1
    %646 = vsyncpa [#allocation9], 1
    %647 = vsyncpa [#allocation12], 1
    %648 = vsyncpa [#allocation15], 1
    %649 = vsyncpa [#allocation18], 1
    %650 = vsyncpa [#allocation4], 1

</llo_original>
